<compile_context>
chip_gen: v6e
topology: v6e:2x2x1
jax: 0.10.0
libtpu: 0.0.40
codegen_flags: <defaults>
</compile_context>

<pallas_src>
import jax
import jax.numpy as jnp
from jax.experimental import pallas as pl
from jax.experimental.pallas import tpu as pltpu


def _attention_weights(att_h_ref, p_att_ref, wa_ref, ba_ref):
    """Softmax attention weights over att_size, shape (TB, S, 1)."""
    # tanh(p_att + att_h): (TB, S, H) + (TB, 1, H) broadcast over att_size
    dot = jnp.tanh(p_att_ref[...] + att_h_ref[...])
    # alpha_net as VPU multiply + lane reduction over H (no degenerate MXU op)
    score = jnp.sum(dot * wa_ref[...], axis=-1, keepdims=True) + ba_ref[0]  # (TB,S,1)
    # softmax over the att_size axis (axis=1)
    m = jnp.max(score, axis=1, keepdims=True)
    e = jnp.exp(score - m)
    return e * pl.reciprocal(jnp.sum(e, axis=1, keepdims=True))             # (TB,S,1)


def _attention_kernel_nomask(att_h_ref, p_att_ref, att_ref, wa_ref, ba_ref,
                             out_ref):
    w = _attention_weights(att_h_ref, p_att_ref, wa_ref, ba_ref)            # (TB,S,1)
    out_ref[...] = jnp.sum(w * att_ref[...], axis=1, keepdims=True)         # (TB,1,D)


def _attention_kernel_masked(att_h_ref, p_att_ref, att_ref, mask_ref, wa_ref,
                             ba_ref, out_ref):
    w = _attention_weights(att_h_ref, p_att_ref, wa_ref, ba_ref)            # (TB,S,1)
    w = w * mask_ref[...]
    w = w * pl.reciprocal(jnp.sum(w, axis=1, keepdims=True))
    out_ref[...] = jnp.sum(w * att_ref[...], axis=1, keepdims=True)         # (TB,1,D)


def attention_pallas(h, att_feats, p_att_feats, params, att_masks=None, *,
                     block_b=None):
    """Pallas implementation of models/VrgModel.py::Attention.forward."""
    h = h.astype(jnp.float32)
    att_feats = att_feats.astype(jnp.float32)
    p_att_feats = p_att_feats.astype(jnp.float32)

    B, R = h.shape
    _, S, D = att_feats.shape
    H = params["wh"].shape[0]
    assert p_att_feats.shape == (B, S, H)

    # h2att hoisted into one fused XLA matmul over the whole batch
    # (pre-transposed weight; no per-grid-step transpose or weight DMA).
    wh_t = params["wh"].T.astype(jnp.float32)                   # (R, H)
    bh = params["bh"].reshape(1, H).astype(jnp.float32)
    att_h = (h @ wh_t + bh).reshape(B, 1, H)                    # (B, 1, H)

    wa3 = params["wa"].reshape(1, 1, H).astype(jnp.float32)     # (1, 1, H)
    ba = params["ba"].reshape(1).astype(jnp.float32)            # (1,) -> SMEM scalar

    # --- batch-tile size ------------------------------------------------------
    if block_b is None:
        # target ~1 MiB of fresh input per grid step (keeps the double-buffered
        # working set well inside the default scoped-VMEM limit on v5e/v6e/v7x)
        per_example_bytes = 4 * S * (H + D + 2) + 4 * (H + D)
        block_b = max(1, (1 << 20) // max(per_example_bytes, 1))
        block_b = min(block_b, 256)
    TB = B if B <= block_b else max(8, (block_b // 8) * 8)      # sublane-aligned tile
    n_tiles = -(-B // TB)
    Bp = n_tiles * TB

    def pad_b(x):
        if Bp == B:
            return x
        return jnp.pad(x, [(0, Bp - B)] + [(0, 0)] * (x.ndim - 1))

    att_h_p = pad_b(att_h)
    p_att_p = pad_b(p_att_feats)
    att_p = pad_b(att_feats)

    data_specs = [
        pl.BlockSpec((TB, 1, H), lambda b: (b, 0, 0)),          # att_h
        pl.BlockSpec((TB, S, H), lambda b: (b, 0, 0)),          # p_att_feats
        pl.BlockSpec((TB, S, D), lambda b: (b, 0, 0)),          # att_feats
    ]
    param_specs = [
        pl.BlockSpec((1, 1, H), lambda b: (0, 0, 0)),           # wa
        pl.BlockSpec(memory_space=pltpu.MemorySpace.SMEM),      # ba scalar
    ]
    out_spec = pl.BlockSpec((TB, 1, D), lambda b: (b, 0, 0))

    if att_masks is None:
        kernel = _attention_kernel_nomask
        in_specs = data_specs + param_specs
        args = (att_h_p, p_att_p, att_p, wa3, ba)
    else:
        mask3 = pad_b(att_masks.reshape(B, S, 1).astype(jnp.float32))
        kernel = _attention_kernel_masked
        in_specs = (data_specs
                    + [pl.BlockSpec((TB, S, 1), lambda b: (b, 0, 0))]
                    + param_specs)
        args = (att_h_p, p_att_p, att_p, mask3, wa3, ba)

    out3 = pl.pallas_call(
        kernel,
        out_shape=jax.ShapeDtypeStruct((Bp, 1, D), jnp.float32),
        grid_spec=pltpu.PrefetchScalarGridSpec(
            num_scalar_prefetch=0,
            grid=(n_tiles,),
            in_specs=in_specs,
            out_specs=out_spec,
        ),
        compiler_params=pltpu.CompilerParams(
            dimension_semantics=("parallel",)),
    )(*args)

    return out3.reshape(Bp, D)[:B]


def attention_ref(h, att_feats, p_att_feats, params, att_masks=None):
    """Pure-JAX reference mirroring the PyTorch forward."""
    B, R = h.shape
    _, S, D = att_feats.shape
    H = params["wh"].shape[0]
    att_h = h @ params["wh"].T + params["bh"]                    # (B, H)
    dot = jnp.tanh(p_att_feats + att_h[:, None, :])              # (B, S, H)
    score = dot.reshape(-1, H) @ params["wa"].reshape(H, 1) + params["ba"]
    score = score.reshape(B, S)
    weight = jax.nn.softmax(score, axis=1)
    if att_masks is not None:
        weight = weight * att_masks.reshape(B, S).astype(jnp.float32)
        weight = weight / jnp.sum(weight, axis=1, keepdims=True)
    return jnp.einsum("bs,bsd->bd", weight, att_feats)


if __name__ == "__main__":
    # small shapes consistent with the module
    B, S = 2, 16           # batch, att_size
    rnn_size = 32          # opt.rnn_size (query dim and feature dim)
    att_hid = 32           # opt.att_hid_size
    D = rnn_size

    key = jax.random.PRNGKey(0)
    k = jax.random.split(key, 8)
    h = jax.random.normal(k[0], (B, rnn_size), dtype=jnp.float32)
    att_feats = jax.random.normal(k[1], (B, S, D), dtype=jnp.float32)
    p_att_feats = jax.random.normal(k[2], (B, S, att_hid), dtype=jnp.float32)
    att_masks = (jax.random.uniform(k[3], (B, S)) > 0.2).astype(jnp.float32)
    att_masks = att_masks.at[:, 0].set(1.0)  # keep at least one valid slot

    params = {
        "wh": 0.05 * jax.random.normal(k[4], (att_hid, rnn_size), dtype=jnp.float32),
        "bh": 0.05 * jax.random.normal(k[5], (att_hid,), dtype=jnp.float32),
        "wa": 0.05 * jax.random.normal(k[6], (1, att_hid), dtype=jnp.float32),
        "ba": 0.05 * jax.random.normal(k[7], (1,), dtype=jnp.float32),
    }

    # masked path
    out = jax.block_until_ready(
        attention_pallas(h, att_feats, p_att_feats, params, att_masks))
    ref = attention_ref(h, att_feats, p_att_feats, params, att_masks)
    assert out.shape == (B, D)
    assert jnp.allclose(out, ref, atol=1e-5, rtol=1e-5), "masked path mismatch"

    # specialized att_masks=None path
    out_nm = jax.block_until_ready(
        attention_pallas(h, att_feats, p_att_feats, params, None))
    ref_nm = attention_ref(h, att_feats, p_att_feats, params, None)
    assert jnp.allclose(out_nm, ref_nm, atol=1e-5, rtol=1e-5), "no-mask path mismatch"

    # exercise the batch-tiled multi-step grid (TB=8, grid=(3,), padded batch)
    B2 = 20
    k2 = jax.random.split(jax.random.PRNGKey(1), 4)
    h2 = jax.random.normal(k2[0], (B2, rnn_size), dtype=jnp.float32)
    att2 = jax.random.normal(k2[1], (B2, S, D), dtype=jnp.float32)
    p_att2 = jax.random.normal(k2[2], (B2, S, att_hid), dtype=jnp.float32)
    m2 = (jax.random.uniform(k2[3], (B2, S)) > 0.2).astype(jnp.float32)
    m2 = m2.at[:, 0].set(1.0)
    out2 = jax.block_until_ready(
        attention_pallas(h2, att2, p_att2, params, m2, block_b=8))
    ref2 = attention_ref(h2, att2, p_att2, params, m2)
    assert out2.shape == (B2, D)
    assert jnp.allclose(out2, ref2, atol=1e-5, rtol=1e-5), "tiled path mismatch"

    print("KERNEL_OK")
</pallas_src>

<mosaic_0001>
module attributes {stable_mosaic.version = 11 : i64} {
  func.func @_attention_kernel_masked(%arg0: i32, %arg1: memref<2x1x32xf32, #tpu.memory_space<vmem>>, %arg2: memref<2x16x32xf32, #tpu.memory_space<vmem>>, %arg3: memref<2x16x32xf32, #tpu.memory_space<vmem>>, %arg4: memref<2x16x1xf32, #tpu.memory_space<vmem>>, %arg5: memref<1x1x32xf32, #tpu.memory_space<vmem>>, %arg6: memref<1xf32, #tpu.memory_space<smem>>, %arg7: memref<2x1x32xf32, #tpu.memory_space<vmem>>) attributes {dimension_semantics = [#tpu.dimension_semantics<parallel>], iteration_bounds = array<i64: 1>, scalar_prefetch = 0 : i64, scratch_operands = 0 : i64, tpu.core_type = #tpu.core_type<tc>, window_params = [{transform_indices = @transform_0, window_bounds = array<i64: 2, 1, 32>}, {transform_indices = @transform_1, window_bounds = array<i64: 2, 16, 32>}, {transform_indices = @transform_2, window_bounds = array<i64: 2, 16, 32>}, {transform_indices = @transform_3, window_bounds = array<i64: 2, 16, 1>}, {pipeline_mode = #tpu.pipeline_mode<synchronous>, transform_indices = @transform_4, window_bounds = array<i64: 1, 1, 32>}, {transform_indices = @transform_5, window_bounds = array<i64: 1>}, {transform_indices = @transform_6, window_bounds = array<i64: 2, 1, 32>}]} {
    %c0 = arith.constant 0 : index
    %c0_0 = arith.constant 0 : index
    %c0_1 = arith.constant 0 : index
    %0 = vector.load %arg2[%c0, %c0_0, %c0_1] : memref<2x16x32xf32, #tpu.memory_space<vmem>>, vector<2x16x32xf32>
    %c0_2 = arith.constant 0 : index
    %c0_3 = arith.constant 0 : index
    %c0_4 = arith.constant 0 : index
    %1 = vector.load %arg1[%c0_2, %c0_3, %c0_4] : memref<2x1x32xf32, #tpu.memory_space<vmem>>, vector<2x1x32xf32>
    %2 = vector.broadcast %1 : vector<2x1x32xf32> to vector<2x16x32xf32>
    %3 = arith.addf %0, %2 : vector<2x16x32xf32>
    %4 = math.tanh %3 : vector<2x16x32xf32>
    %c0_5 = arith.constant 0 : index
    %c0_6 = arith.constant 0 : index
    %c0_7 = arith.constant 0 : index
    %5 = vector.load %arg5[%c0_5, %c0_6, %c0_7] : memref<1x1x32xf32, #tpu.memory_space<vmem>>, vector<1x1x32xf32>
    %6 = vector.broadcast %5 : vector<1x1x32xf32> to vector<2x16x32xf32>
    %7 = arith.mulf %4, %6 : vector<2x16x32xf32>
    %cst = arith.constant dense<0.000000e+00> : vector<2x16xf32>
    %8 = vector.multi_reduction <add>, %7, %cst [2] : vector<2x16x32xf32> to vector<2x16xf32>
    %9 = vector.shape_cast %8 : vector<2x16xf32> to vector<2x16x1xf32>
    %c0_8 = arith.constant 0 : index
    %10 = memref.load %arg6[%c0_8] : memref<1xf32, #tpu.memory_space<smem>>
    %11 = vector.broadcast %10 : f32 to vector<2x16x1xf32>
    %12 = arith.addf %9, %11 : vector<2x16x1xf32>
    %cst_9 = arith.constant dense<0xFF800000> : vector<2x1xf32>
    %13 = vector.multi_reduction <maximumf>, %12, %cst_9 [1] : vector<2x16x1xf32> to vector<2x1xf32>
    %14 = vector.shape_cast %13 : vector<2x1xf32> to vector<2x1x1xf32>
    %15 = vector.broadcast %14 : vector<2x1x1xf32> to vector<2x16x1xf32>
    %16 = arith.subf %12, %15 : vector<2x16x1xf32>
    %17 = math.exp %16 : vector<2x16x1xf32>
    %cst_10 = arith.constant dense<0.000000e+00> : vector<2x1xf32>
    %18 = vector.multi_reduction <add>, %17, %cst_10 [1] : vector<2x16x1xf32> to vector<2x1xf32>
    %19 = vector.shape_cast %18 : vector<2x1xf32> to vector<2x1x1xf32>
    %20 = tpu.reciprocal %19 : vector<2x1x1xf32> -> vector<2x1x1xf32>
    %21 = vector.broadcast %20 : vector<2x1x1xf32> to vector<2x16x1xf32>
    %22 = arith.mulf %17, %21 : vector<2x16x1xf32>
    %c0_11 = arith.constant 0 : index
    %c0_12 = arith.constant 0 : index
    %c0_13 = arith.constant 0 : index
    %23 = vector.load %arg4[%c0_11, %c0_12, %c0_13] : memref<2x16x1xf32, #tpu.memory_space<vmem>>, vector<2x16x1xf32>
    %24 = arith.mulf %22, %23 : vector<2x16x1xf32>
    %cst_14 = arith.constant dense<0.000000e+00> : vector<2x1xf32>
    %25 = vector.multi_reduction <add>, %24, %cst_14 [1] : vector<2x16x1xf32> to vector<2x1xf32>
    %26 = vector.shape_cast %25 : vector<2x1xf32> to vector<2x1x1xf32>
    %27 = tpu.reciprocal %26 : vector<2x1x1xf32> -> vector<2x1x1xf32>
    %28 = vector.broadcast %27 : vector<2x1x1xf32> to vector<2x16x1xf32>
    %29 = arith.mulf %24, %28 : vector<2x16x1xf32>
    %c0_15 = arith.constant 0 : index
    %c0_16 = arith.constant 0 : index
    %c0_17 = arith.constant 0 : index
    %30 = vector.load %arg3[%c0_15, %c0_16, %c0_17] : memref<2x16x32xf32, #tpu.memory_space<vmem>>, vector<2x16x32xf32>
    %31 = vector.broadcast %29 : vector<2x16x1xf32> to vector<2x16x32xf32>
    %32 = arith.mulf %31, %30 : vector<2x16x32xf32>
    %cst_18 = arith.constant dense<0.000000e+00> : vector<2x32xf32>
    %33 = vector.multi_reduction <add>, %32, %cst_18 [1] : vector<2x16x32xf32> to vector<2x32xf32>
    %34 = vector.shape_cast %33 : vector<2x32xf32> to vector<2x1x32xf32>
    %c0_19 = arith.constant 0 : index
    %c0_20 = arith.constant 0 : index
    %c0_21 = arith.constant 0 : index
    %35 = vector.load %arg7[%c0_19, %c0_20, %c0_21] : memref<2x1x32xf32, #tpu.memory_space<vmem>>, vector<2x1x32xf32>
    tpu.vector_store %arg7[%c0_19, %c0_20, %c0_21], %34 {strides = array<i32>} : memref<2x1x32xf32, #tpu.memory_space<vmem>>, vector<2x1x32xf32>,
    return
  }
  func.func @transform_0(%arg0: i32) -> (i32, i32, i32) {
    %c0_i32 = arith.constant 0 : i32
    %c0_i32_0 = arith.constant 0 : i32
    %c0_i32_1 = arith.constant 0 : i32
    return %arg0, %c0_i32, %c0_i32_0 : i32, i32, i32
  }
  func.func @transform_1(%arg0: i32) -> (i32, i32, i32) {
    %c0_i32 = arith.constant 0 : i32
    %c0_i32_0 = arith.constant 0 : i32
    %c0_i32_1 = arith.constant 0 : i32
    return %arg0, %c0_i32, %c0_i32_0 : i32, i32, i32
  }
  func.func @transform_2(%arg0: i32) -> (i32, i32, i32) {
    %c0_i32 = arith.constant 0 : i32
    %c0_i32_0 = arith.constant 0 : i32
    %c0_i32_1 = arith.constant 0 : i32
    return %arg0, %c0_i32, %c0_i32_0 : i32, i32, i32
  }
  func.func @transform_3(%arg0: i32) -> (i32, i32, i32) {
    %c0_i32 = arith.constant 0 : i32
    %c0_i32_0 = arith.constant 0 : i32
    %c0_i32_1 = arith.constant 0 : i32
    return %arg0, %c0_i32, %c0_i32_0 : i32, i32, i32
  }
  func.func @transform_4(%arg0: i32) -> (i32, i32, i32) {
    %c0_i32 = arith.constant 0 : i32
    %c0_i32_0 = arith.constant 0 : i32
    %c0_i32_1 = arith.constant 0 : i32
    %c0_i32_2 = arith.constant 0 : i32
    return %c0_i32, %c0_i32_0, %c0_i32_1 : i32, i32, i32
  }
  func.func @transform_5(%arg0: i32) -> i32 {
    %c0_i32 = arith.constant 0 : i32
    %c0_i32_0 = arith.constant 0 : i32
    return %c0_i32 : i32
  }
  func.func @transform_6(%arg0: i32) -> (i32, i32, i32) {
    %c0_i32 = arith.constant 0 : i32
    %c0_i32_0 = arith.constant 0 : i32
    %c0_i32_1 = arith.constant 0 : i32
    return %arg0, %c0_i32, %c0_i32_0 : i32, i32, i32
  }
}

</mosaic_0001>

<llo_original>
// kernel: tpu_custom_call.1
$region0: #{tpu_custom_call.1}
  #allocation0 [shape = 'u32[]', space=smem, size = 0x4, offset = 0x4, fixed_abs, tag = 'smem constant byte address 0x4 - core index']
  #allocation1 [shape = 'u32[144,128]{1,0:T(1,128)}', space=vmem, size = 0x12000, scoped, tag = 'internal scratch']
  #allocation2 [shape = 'f32[1]{0:T(128)S(6)}', space=smem, size = 0x200, scoped, tag = 'scoped memory for tpu_custom_call.1']
  %s0 = inlined_call_operand.vmem [shape: f32[2,1,32], index: 0, kind: input, shape index: {}]
  %s1 = inlined_call_operand.vmem [shape: f32[2,16,32], index: 1, kind: input, shape index: {}]
  %s2 = inlined_call_operand.hbm [shape: f32[2,16,32], index: 2, kind: input, shape index: {}]
  %s3 = inlined_call_operand.vmem [shape: f32[2,16,1], index: 3, kind: input, shape index: {}]
  %s4 = inlined_call_operand.vmem [shape: f32[1,1,32], index: 4, kind: input, shape index: {}]
  %s5 = inlined_call_operand.<no memory space> [shape: f32[1], index: 5, kind: input, shape index: {}]
  %s6 = inlined_call_operand.hbm [shape: f32[2,1,32], index: 6, kind: output, shape index: {}]
  %s7 = sld [smem:[#allocation0]]
  $region38: #{tpu_custom_call.1} parent=0
    _
  %s9 = ssub.s32 1, %s7
  %s10 = scalar_select 0, %s9, %s7
  %11 = sst [smem:[#allocation2]] %s5
  $region1: #{tpu_custom_call.1} parent=0
    #allocation3 [shape = 'u8[16384]{0}', space=vmem, size = 0x4000, scoped, tag = 'input window, operand 2, single buffered']
    #allocation4 [shape = 's32[1]{0}', space=sflag, size = 0x4, scoped, tag = 'scoped memory for tpu_custom_call.1']
    #allocation5 [shape = 's32[1]{0}', space=sflag, size = 0x4, scoped, tag = 'scoped memory for tpu_custom_call.1']
    #allocation6 [shape = 'u8[1024]{0}', space=vmem, size = 0x400, scoped, tag = 'output window, operand 0, single buffered']
    %12 = vsyncpa [#allocation4], 0
    %13 = vsyncpa [#allocation5], 0
    // Predicated region
    $region2: #{tpu_custom_call.1} parent=1 // pred_check
      _
    $region3: #{tpu_custom_call.1} parent=1 // pred_check_branch
      %15 = sbr.rel (0) target = $region5
    $region4: #{tpu_custom_call.1} parent=1 // pred_region
      _
    $region5: #{tpu_custom_call.1} parent=1 // pred_fallthru
      _
    // Predicated region
    $region6: #{tpu_custom_call.1} parent=1 // pred_check
      _
    $region7: #{tpu_custom_call.1} parent=1 // pred_check_branch
      %17 = sbr.rel (0) target = $region9
    $region8: #{tpu_custom_call.1} parent=1 // pred_region
      _
    $region9: #{tpu_custom_call.1} parent=1 // pred_fallthru
      _
    // Predicated region
    $region10: #{tpu_custom_call.1} parent=1 // pred_check
      _
    $region11: #{tpu_custom_call.1} parent=1 // pred_check_branch
      %19 = sbr.rel (0) target = $region13
    $region12: #{tpu_custom_call.1} parent=1 // pred_region
      %s21 = ssub.s32 512, 512
      %22 = vsyncadd [#allocation4], %s21
      %s23 = sshll.u32 [#allocation3], 4
      %s24 = int_to_ptr.vmem [resolvable:$true] %s23
      %29 = dma.hbm_to_vmem [thread:$0]  %s2, 512, %s24, [#allocation4], 128, 128, 8
    $region13: #{tpu_custom_call.1} parent=1 // pred_fallthru
      _
    // Predicated region
    $region14: #{tpu_custom_call.1} parent=1 // pred_check
      _
    $region15: #{tpu_custom_call.1} parent=1 // pred_check_branch
      %31 = sbr.rel (0) target = $region17
    $region16: #{tpu_custom_call.1} parent=1 // pred_region
      _
    $region17: #{tpu_custom_call.1} parent=1 // pred_fallthru
      _
    // Predicated region
    $region18: #{tpu_custom_call.1} parent=1 // pred_check
      _
    $region19: #{tpu_custom_call.1} parent=1 // pred_check_branch
      %33 = sbr.rel (0) target = $region21
    $region20: #{tpu_custom_call.1} parent=1 // pred_region
      _
    $region21: #{tpu_custom_call.1} parent=1 // pred_fallthru
      _
    // Predicated region
    $region22: #{tpu_custom_call.1} parent=1 // pred_check
      _
    $region23: #{tpu_custom_call.1} parent=1 // pred_check_branch
      %35 = sbr.rel (0) target = $region25
    $region24: #{tpu_custom_call.1} parent=1 // pred_region
      _
    $region25: #{tpu_custom_call.1} parent=1 // pred_fallthru
      _
    // Predicated region
    $region26: #{tpu_custom_call.1} parent=1 // pred_check
      _
    $region27: #{tpu_custom_call.1} parent=1 // pred_check_branch
      %37 = sbr.rel (0) target = $region29
    $region28: #{tpu_custom_call.1} parent=1 // pred_region
      %38 = dma.done [#allocation4], 512
    $region29: #{tpu_custom_call.1} parent=1 // pred_fallthru
      _
    %v39 = vld [vmem:[%s1] sm:$0xff]
    %v40 = vld [vmem:[%s1 + $0x8] sm:$0xff]
    %v41 = vld [vmem:[%s1 + $0x10] sm:$0xff]
    %v42 = vld [vmem:[%s1 + $0x18] sm:$0xff]
    %v43 = vld [vmem:[%s0] sm:$0x1]
    %v44 = vld [vmem:[%s0 + $0x1] sm:$0x1]
    %v47 = vlaneseq
    %v48 = vshrl.u32 %v47, 7
    %v49 = vsub.s32 0, %v48
    %v50 = vrot.slane %v43, %v49
    %v51 = vlaneseq
    %v52 = vshrl.u32 %v51, 7
    %v53 = vsub.s32 0, %v52
    %v54 = vrot.slane %v44, %v53
    %v57 = vadd.f32 %v39, %v50
    %v58 = vadd.f32 %v40, %v50
    %v59 = vadd.f32 %v41, %v54
    %v60 = vadd.f32 %v42, %v54
    %v61 = vtanh.pop %v57
    %v62 = vtanh.pop %v58
    %v63 = vtanh.pop %v59
    %v64 = vtanh.pop %v60
    %v65 = vld [vmem:[%s4] sm:$0x1]
    %v67 = vlaneseq
    %v68 = vshrl.u32 %v67, 7
    %v69 = vsub.s32 0, %v68
    %v70 = vrot.slane %v65, %v69
    %v72 = vmul.f32 %v61, %v70
    %v73 = vmul.f32 %v62, %v70
    %v74 = vmul.f32 %v63, %v70
    %v75 = vmul.f32 %v64, %v70
    %vm76 = vcmask 261120
    %v77 = vsel %vm76, %v72, 0.0
    %78 = vadd.xlane.f32.xlu0 %v77
    %v79 = vpop.xlane.xlu0 %78
    %v80 = vsel %vm76, %v73, 0.0
    %81 = vadd.xlane.f32.xlu0 %v80
    %v82 = vpop.xlane.xlu0 %81
    %v83 = vsel %vm76, %v74, 0.0
    %84 = vadd.xlane.f32.xlu0 %v83
    %v85 = vpop.xlane.xlu0 %84
    %v86 = vsel %vm76, %v75, 0.0
    %87 = vadd.xlane.f32.xlu0 %v86
    %v88 = vpop.xlane.xlu0 %87
    %s89 = sld [smem:[#allocation2]]
    %v90 = vstv %s89
    %v91 = vadd.f32 %v79, %v90
    %v92 = vadd.f32 %v82, %v90
    %v93 = vadd.f32 %v85, %v90
    %v94 = vadd.f32 %v88, %v90
    %v95 = vmax.f32 %v91, %v92
    %v96 = vrot.slane %v95, 4
    %v97 = vmax.f32 %v95, %v96
    %v98 = vrot.slane %v97, 2
    %v99 = vmax.f32 %v97, %v98
    %v100 = vrot.slane %v99, 1
    %v101 = vmax.f32 %v99, %v100
    %v102 = vmax.f32 %v93, %v94
    %v103 = vrot.slane %v102, 4
    %v104 = vmax.f32 %v102, %v103
    %v105 = vrot.slane %v104, 2
    %v106 = vmax.f32 %v104, %v105
    %v107 = vrot.slane %v106, 1
    %v108 = vmax.f32 %v106, %v107
    %v109 = vsub.f32 %v91, %v101
    %v110 = vsub.f32 %v92, %v101
    %v111 = vsub.f32 %v93, %v108
    %v112 = vsub.f32 %v94, %v108
    %v113 = vmul.f32 %v109, 1.442695
    %v114 = vpow.pop %v113
    %v115 = vmul.f32 %v110, 1.442695
    %v116 = vpow.pop %v115
    %v117 = vmul.f32 %v111, 1.442695
    %v118 = vpow.pop %v117
    %v119 = vmul.f32 %v112, 1.442695
    %v120 = vpow.pop %v119
    %v121 = vadd.f32 %v114, %v116
    %v122 = vrot.slane %v121, 4
    %v123 = vadd.f32 %v121, %v122
    %v124 = vrot.slane %v123, 2
    %v125 = vadd.f32 %v123, %v124
    %v126 = vrot.slane %v125, 1
    %v127 = vadd.f32 %v125, %v126
    %v128 = vadd.f32 %v118, %v120
    %v129 = vrot.slane %v128, 4
    %v130 = vadd.f32 %v128, %v129
    %v131 = vrot.slane %v130, 2
    %v132 = vadd.f32 %v130, %v131
    %v133 = vrot.slane %v132, 1
    %v134 = vadd.f32 %v132, %v133
    %v135 = vrcp.pop %v127
    %v136 = vrcp.pop %v134
    %v137 = vmul.f32 %v114, %v135
    %v138 = vmul.f32 %v116, %v135
    %v139 = vmul.f32 %v118, %v136
    %v140 = vmul.f32 %v120, %v136
    %v141 = vld [vmem:[%s3] sm:$0xff]
    %v142 = vld [vmem:[%s3 + $0x8] sm:$0xff]
    %v143 = vld [vmem:[%s3 + $0x10] sm:$0xff]
    %v144 = vld [vmem:[%s3 + $0x18] sm:$0xff]
    %v145 = vmul.f32 %v137, %v141
    %v146 = vmul.f32 %v138, %v142
    %v147 = vmul.f32 %v139, %v143
    %v148 = vmul.f32 %v140, %v144
    %vm149 = vcmask 7168
    %v150 = vsel %vm149, %v145, 0.0
    %v151 = vsel %vm149, %v146, 0.0
    %v152 = vadd.f32 %v150, %v151
    %v153 = vrot.slane %v152, 4
    %v154 = vadd.f32 %v152, %v153
    %v155 = vrot.slane %v154, 2
    %v156 = vadd.f32 %v154, %v155
    %v157 = vrot.slane %v156, 1
    %v158 = vadd.f32 %v156, %v157
    %v159 = vsel %vm149, %v147, 0.0
    %v160 = vsel %vm149, %v148, 0.0
    %v161 = vadd.f32 %v159, %v160
    %v162 = vrot.slane %v161, 4
    %v163 = vadd.f32 %v161, %v162
    %v164 = vrot.slane %v163, 2
    %v165 = vadd.f32 %v163, %v164
    %v166 = vrot.slane %v165, 1
    %v167 = vadd.f32 %v165, %v166
    %v168 = vrcp.pop %v158
    %v169 = vrcp.pop %v167
    %v170 = vmul.f32 %v145, %v168
    %v171 = vmul.f32 %v146, %v168
    %v172 = vmul.f32 %v147, %v169
    %v173 = vmul.f32 %v148, %v169
    %v174 = vld [vmem:[#allocation3] sm:$0xff]
    %v175 = vld [vmem:[#allocation3 + $0x8] sm:$0xff]
    %v176 = vld [vmem:[#allocation3 + $0x10] sm:$0xff]
    %v177 = vld [vmem:[#allocation3 + $0x18] sm:$0xff]
    %179 = vset.pattern.permute.xlu0 0
    %180 = vperm.xlu0 %179, %v170
    %v181 = vpop.permute.xlu0 %180
    %184 = vset.pattern.permute.xlu0 0
    %185 = vperm.xlu0 %184, %v171
    %v186 = vpop.permute.xlu0 %185
    %189 = vset.pattern.permute.xlu0 0
    %190 = vperm.xlu0 %189, %v172
    %v191 = vpop.permute.xlu0 %190
    %194 = vset.pattern.permute.xlu0 0
    %195 = vperm.xlu0 %194, %v173
    %v196 = vpop.permute.xlu0 %195
    %v198 = vmul.f32 %v181, %v174
    %v199 = vmul.f32 %v186, %v175
    %v200 = vmul.f32 %v191, %v176
    %v201 = vmul.f32 %v196, %v177
    %v202 = vsel %vm76, %v198, 0.0
    %v203 = vsel %vm76, %v199, 0.0
    %v204 = vadd.f32 %v202, %v203
    %v205 = vrot.slane %v204, 4
    %v206 = vadd.f32 %v204, %v205
    %v207 = vrot.slane %v206, 2
    %v208 = vadd.f32 %v206, %v207
    %v209 = vrot.slane %v208, 1
    %v210 = vadd.f32 %v208, %v209
    %v211 = vsel %vm76, %v200, 0.0
    %v212 = vsel %vm76, %v201, 0.0
    %v213 = vadd.f32 %v211, %v212
    %v214 = vrot.slane %v213, 4
    %v215 = vadd.f32 %v213, %v214
    %v216 = vrot.slane %v215, 2
    %v217 = vadd.f32 %v215, %v216
    %v218 = vrot.slane %v217, 1
    %v219 = vadd.f32 %v217, %v218
    %vm220 = vcmask 253952
    %221 = vst.msk [vmem:[#allocation6] sm:$0x1] %vm220, %v210
    %222 = vst.msk [vmem:[#allocation6 + $0x1] sm:$0x1] %vm220, %v219
    // Predicated region
    $region30: #{tpu_custom_call.1} parent=1 // pred_check
      _
    $region31: #{tpu_custom_call.1} parent=1 // pred_check_branch
      %224 = sbr.rel (0) target = $region33
    $region32: #{tpu_custom_call.1} parent=1 // pred_region
      %s226 = ssub.s32 32, 32
      %227 = vsyncadd [#allocation5], %s226
      %s228 = sshll.u32 [#allocation6], 4
      %s229 = int_to_ptr.vmem [resolvable:$true] %s228
      %234 = dma.vmem_to_hbm [thread:$0]  %s229, 32, %s6, [#allocation5], 16, 16, 1
    $region33: #{tpu_custom_call.1} parent=1 // pred_fallthru
      _
    // Predicated region
    $region34: #{tpu_custom_call.1} parent=1 // pred_check
      _
    $region35: #{tpu_custom_call.1} parent=1 // pred_check_branch
      %236 = sbr.rel (0) target = $region37
    $region36: #{tpu_custom_call.1} parent=1 // pred_region
      %237 = dma.done [#allocation5], 32
    $region37: #{tpu_custom_call.1} parent=1 // pred_fallthru
      _
    %238 = vsyncpa [#allocation4], 1
    %239 = vsyncpa [#allocation5], 1

</llo_original>
